<compile_context>
chip_gen: v7x
topology: tpu7x:2x2x1
jax: 0.10.0
libtpu: 0.0.40
codegen_flags: <defaults>
</compile_context>

<pallas_src>
import math
import numpy as np
import jax
import jax.numpy as jnp
from jax.experimental import pallas as pl
from jax.experimental.pallas import tpu as pltpu


def _round_up(x, m):
    return ((x + m - 1) // m) * m


def _cdiv(a, b):
    return -(-a // b)


# ----------------------------------------------------------------------------
# Butterfly sparse-mask construction (plain numpy glue; mirrors __init__).
# ----------------------------------------------------------------------------
def make_butterfly_mask(in_features, out_features, window_size=6, stripes=3, step=1):
    pmin = min(in_features, out_features)
    pmax = max(in_features, out_features)
    tmp_mask = np.zeros((pmin, pmax), dtype=np.float32)
    stride = int(math.sqrt(pmin))
    d = math.ceil(pmax / pmin)
    for k in range(stripes):
        patch_start = stride * k
        for i in range(0, pmin, window_size):
            tmp_mask[patch_start + i:patch_start + i + window_size,
                     i * d:i * d + step * d * window_size] = 1.0
    for k in range(stripes):
        patch_start = stride * k
        for i in range(0, pmin, window_size):
            tmp_mask[i:i + window_size,
                     (i + patch_start) * d:(patch_start + i) * d + step * d * window_size] = 1.0
    # TODO(synk): generate_mask(tmp_mask, block_size) is not defined in the source;
    # with block_size=None we treat it as identity.
    if in_features <= out_features:
        return tmp_mask.T          # (out_features, in_features)
    return tmp_mask                # (out_features, in_features)


# ----------------------------------------------------------------------------
# Pallas kernel.  Weight arrives pre-masked / pre-transposed / pre-padded as
# (Kp, Np) bf16.  The s (reduction) axis visits only the non-zero k-blocks of
# output-column block j, driven by the scalar-prefetched tables.
# ----------------------------------------------------------------------------
def _bf_block_sparse_kernel(kblk_ref, cnt_ref, x_ref, w_ref, b_ref, o_ref, acc_ref):
    j = pl.program_id(1)
    s = pl.program_id(2)

    @pl.when(s == 0)
    def _():
        # Fold the f32 bias into the accumulator init.
        acc_ref[...] = jnp.broadcast_to(b_ref[...], acc_ref.shape)

    @pl.when(s < cnt_ref[j])
    def _():
        acc_ref[...] += jnp.dot(x_ref[...], w_ref[...],
                                preferred_element_type=jnp.float32)

    @pl.when(s == pl.num_programs(2) - 1)
    def _():
        o_ref[...] = acc_ref[...].astype(o_ref.dtype)


# ----------------------------------------------------------------------------
# Host-side (static) block-sparsity tables.
# ----------------------------------------------------------------------------
def _build_block_tables(mask_t_padded, tk, tn):
    Kp, Np = mask_t_padded.shape
    nk, nj = Kp // tk, Np // tn
    blk = mask_t_padded.reshape(nk, tk, nj, tn).sum(axis=(1, 3)) > 0    # (nk, nj)
    counts = blk.sum(axis=0).astype(np.int32)                           # (nj,)
    max_steps = max(int(counts.max()), 1) if counts.size else 1
    kblk = np.zeros((nj, max_steps), dtype=np.int32)
    for j in range(nj):
        nz = np.nonzero(blk[:, j])[0]
        if nz.size:
            kblk[j, :nz.size] = nz
            kblk[j, nz.size:] = nz[-1]   # pad with a repeat -> no extra DMA
    return kblk, counts, max_steps


# ----------------------------------------------------------------------------
# Deterministic parameter init (mimics reset_parameters semantics).
# ----------------------------------------------------------------------------
def init_params(key, in_features, out_features, mask):
    kw, kb = jax.random.split(key)
    fan_in = in_features
    w_bound = 1.0 / math.sqrt(fan_in)
    weight = jax.random.uniform(kw, (out_features, in_features),
                                minval=-w_bound, maxval=w_bound, dtype=jnp.float32)
    density = float(np.sum(mask)) / (in_features * out_features)
    weight = weight / math.sqrt(density)
    b_bound = 1.0 / math.sqrt(fan_in)
    bias = jax.random.uniform(kb, (out_features,),
                              minval=-b_bound, maxval=b_bound, dtype=jnp.float32)
    return weight, bias


# ----------------------------------------------------------------------------
# Module-like wrapper: all weight/mask preprocessing is done once here.
# ----------------------------------------------------------------------------
class ButterflyLinearTPU:
    """Pallas-TPU ButterflyLinear: y = x @ (sparse_mask * W).T + b."""

    def __init__(self, in_features, out_features, *, key,
                 window_size=6, stripes=3, step=1,
                 tn=256, tk=256, max_tm=256, compute_dtype=jnp.bfloat16):
        self.in_features = in_features
        self.out_features = out_features
        self.compute_dtype = compute_dtype
        self.max_tm = max_tm

        mask = make_butterfly_mask(in_features, out_features,
                                   window_size=window_size, stripes=stripes, step=step)
        self.sparse_mask = mask                                   # (out, in) numpy
        self.weight, self.bias = init_params(key, in_features, out_features, mask)

        K, N = in_features, out_features
        # tk: 128-multiple ~divisor of round_up(K,128) -> minimal K padding.
        Kp128 = _round_up(K, 128)
        nk = _cdiv(Kp128, tk)
        self.tk = _round_up(_cdiv(Kp128, nk), 128)
        self.Kp = self.tk * nk
        # tn: keep >= 2 output-column blocks when possible (v7x megacore).
        Np128 = _round_up(N, 128)
        tn = min(tn, Np128)
        if Np128 // tn < 2 and Np128 >= 256:
            tn = _round_up(_cdiv(Np128, 2), 128)
        self.tn = tn
        self.Np = _round_up(Np128, tn)

        # --- one-time weight preprocessing (hoisted out of forward) ---
        w_t = (jnp.asarray(mask, jnp.float32) * self.weight).T            # (K, N)
        w_t = jnp.pad(w_t, ((0, self.Kp - K), (0, self.Np - N)))
        self.w_t = w_t.astype(compute_dtype)                              # (Kp, Np) bf16
        self.bias2d = jnp.pad(self.bias.reshape(1, N).astype(jnp.float32),
                              ((0, 0), (0, self.Np - N)))                 # (1, Np) f32

        # --- one-time block-sparsity tables (mask is static) ---
        mask_t_p = np.zeros((self.Kp, self.Np), dtype=np.float32)
        mask_t_p[:K, :N] = mask.T
        kblk, counts, max_steps = _build_block_tables(mask_t_p, self.tk, self.tn)
        self.kblk = jnp.asarray(kblk)        # (nj, max_steps) int32, SMEM-prefetched
        self.counts = jnp.asarray(counts)    # (nj,)           int32, SMEM-prefetched
        self.max_steps = max_steps
        self.block_density = float(counts.sum()) / max(
            1, counts.shape[0] * (self.Kp // self.tk))

    def __call__(self, x):
        B, K = x.shape
        assert K == self.in_features
        out_dtype = x.dtype
        # bf16 sublane packing is 16 rows -> round the batch tile to 16.
        tm = min(self.max_tm, _round_up(B, 16))
        Bp = _round_up(B, tm)

        xc = x.astype(self.compute_dtype)
        if (Bp, self.Kp) != (B, K):
            xc = jnp.pad(xc, ((0, Bp - B), (0, self.Kp - K)))

        tn, tk = self.tn, self.tk
        grid = (Bp // tm, self.Np // tn, self.max_steps)

        out = pl.pallas_call(
            _bf_block_sparse_kernel,
            out_shape=jax.ShapeDtypeStruct((Bp, self.Np), out_dtype),
            grid_spec=pltpu.PrefetchScalarGridSpec(
                num_scalar_prefetch=2,
                grid=grid,
                in_specs=[
                    # x: (tm, tk) at the s-th non-zero k-block of column block j
                    pl.BlockSpec((tm, tk),
                                 lambda i, j, s, kblk, cnt: (i, kblk[j, s])),
                    # masked W^T: (tk, tn) non-zero block
                    pl.BlockSpec((tk, tn),
                                 lambda i, j, s, kblk, cnt: (kblk[j, s], j)),
                    # bias: (1, tn) f32
                    pl.BlockSpec((1, tn),
                                 lambda i, j, s, kblk, cnt: (0, j)),
                ],
                out_specs=pl.BlockSpec((tm, tn),
                                       lambda i, j, s, kblk, cnt: (i, j)),
                scratch_shapes=[pltpu.VMEM((tm, tn), jnp.float32)],
            ),
            compiler_params=pltpu.CompilerParams(
                dimension_semantics=("parallel", "parallel", "arbitrary"),
                vmem_limit_bytes=48 * 1024 * 1024),   # v7x-safe (64 MiB physical)
        )(self.kblk, self.counts, xc, self.w_t, self.bias2d)

        return out[:B, :self.out_features]


# ----------------------------------------------------------------------------
# Tests.
# ----------------------------------------------------------------------------
def _run_case(key, batch, in_features, out_features):
    kx, kp = jax.random.split(key)
    layer = ButterflyLinearTPU(in_features, out_features, key=kp)
    x = jax.random.normal(kx, (batch, in_features), dtype=jnp.float32)

    y = layer(x)
    y = jax.block_until_ready(y)
    assert y.shape == (batch, out_features)
    y_np = np.asarray(y)

    # Strict check: reference with identically bf16-rounded operands (f32 host math),
    # so the only difference is MXU accumulation order.
    mask = layer.sparse_mask
    w_masked_t = np.asarray((jnp.asarray(mask, jnp.float32) * layer.weight).T
                            .astype(jnp.bfloat16).astype(jnp.float32))
    xb = np.asarray(x.astype(jnp.bfloat16).astype(jnp.float32))
    bias = np.asarray(layer.bias, np.float32)
    y_ref_bf16 = xb @ w_masked_t + bias
    np.testing.assert_allclose(y_np, y_ref_bf16, rtol=2e-3, atol=2e-3)

    # Looser sanity check vs. the full-precision f32 reference (bf16 input rounding).
    y_ref_f32 = np.asarray(x, np.float32) @ (mask * np.asarray(layer.weight)).T + bias
    np.testing.assert_allclose(y_np, y_ref_f32, rtol=5e-2, atol=5e-2)


if __name__ == "__main__":
    key = jax.random.PRNGKey(0)
    k1, k2 = jax.random.split(key)

    # Small shape (single reduction step, exercises batch padding).
    _run_case(k1, batch=8, in_features=128, out_features=256)

    # Larger K (multi-step ragged block-sparse reduction path).
    _run_case(k2, batch=16, in_features=1024, out_features=512)

    print("KERNEL_OK")
</pallas_src>

<mosaic_0001>
module attributes {stable_mosaic.version = 11 : i64} {
  func.func @_bf_block_sparse_kernel(%arg0: i32, %arg1: i32, %arg2: i32, %arg3: memref<2x1xi32, #tpu.memory_space<smem>>, %arg4: memref<2xi32, #tpu.memory_space<smem>>, %arg5: memref<16x128xbf16, #tpu.memory_space<vmem>>, %arg6: memref<128x128xbf16, #tpu.memory_space<vmem>>, %arg7: memref<1x128xf32, #tpu.memory_space<vmem>>, %arg8: memref<16x128xf32, #tpu.memory_space<vmem>>, %arg9: memref<16x128xf32, #tpu.memory_space<vmem>>) attributes {dimension_semantics = [#tpu.dimension_semantics<parallel>, #tpu.dimension_semantics<parallel>, #tpu.dimension_semantics<arbitrary>], iteration_bounds = array<i64: 1, 2, 1>, scalar_prefetch = 2 : i64, scratch_operands = 1 : i64, tpu.core_type = #tpu.core_type<tc>, window_params = [{transform_indices = @transform_0, window_bounds = array<i64: 16, 128>}, {transform_indices = @transform_1, window_bounds = array<i64: 128, 128>}, {transform_indices = @transform_2, window_bounds = array<i64: 1, 128>}, {transform_indices = @transform_3, window_bounds = array<i64: 16, 128>}]} {
    %c0_i32 = arith.constant 0 : i32
    %0 = arith.cmpi eq, %arg2, %c0_i32 : i32
    %1 = arith.extui %0 : i1 to i32
    %c0_i32_0 = arith.constant 0 : i32
    %2 = arith.cmpi ne, %1, %c0_i32_0 : i32
    scf.if %2 {
      %c0 = arith.constant 0 : index
      %c0_4 = arith.constant 0 : index
      %11 = vector.load %arg7[%c0, %c0_4] : memref<1x128xf32, #tpu.memory_space<vmem>>, vector<1x128xf32>
      %12 = vector.shape_cast %11 : vector<1x128xf32> to vector<1x128xf32>
      %13 = vector.broadcast %12 : vector<1x128xf32> to vector<16x128xf32>
      %c0_5 = arith.constant 0 : index
      %c0_6 = arith.constant 0 : index
      %14 = vector.load %arg9[%c0_5, %c0_6] : memref<16x128xf32, #tpu.memory_space<vmem>>, vector<16x128xf32>
      tpu.vector_store %arg9[%c0_5, %c0_6], %13 {strides = array<i32>} : memref<16x128xf32, #tpu.memory_space<vmem>>, vector<16x128xf32>,
    } else {
    }
    %3 = arith.index_cast %arg1 : i32 to index
    %4 = memref.load %arg4[%3] : memref<2xi32, #tpu.memory_space<smem>>
    %5 = arith.cmpi slt, %arg2, %4 : i32
    %6 = arith.extui %5 : i1 to i32
    %c0_i32_1 = arith.constant 0 : i32
    %7 = arith.cmpi ne, %6, %c0_i32_1 : i32
    scf.if %7 {
      %c0 = arith.constant 0 : index
      %c0_4 = arith.constant 0 : index
      %11 = vector.load %arg9[%c0, %c0_4] : memref<16x128xf32, #tpu.memory_space<vmem>>, vector<16x128xf32>
      %c0_5 = arith.constant 0 : index
      %c0_6 = arith.constant 0 : index
      %12 = vector.load %arg5[%c0_5, %c0_6] : memref<16x128xbf16, #tpu.memory_space<vmem>>, vector<16x128xbf16>
      %c0_7 = arith.constant 0 : index
      %c0_8 = arith.constant 0 : index
      %13 = vector.load %arg6[%c0_7, %c0_8] : memref<128x128xbf16, #tpu.memory_space<vmem>>, vector<128x128xbf16>
      %cst = arith.constant dense<0.000000e+00> : vector<16x128xf32>
      %14 = tpu.matmul %12, %13, %cst {dimension_numbers = #tpu.dot_dimension_numbers<[1], [0], [0], [1], [0, 0, 1, 1], [], []>} : vector<16x128xbf16>, vector<128x128xbf16>, vector<16x128xf32> -> vector<16x128xf32>
      %15 = arith.addf %11, %14 : vector<16x128xf32>
      %c0_9 = arith.constant 0 : index
      %c0_10 = arith.constant 0 : index
      %16 = vector.load %arg9[%c0_9, %c0_10] : memref<16x128xf32, #tpu.memory_space<vmem>>, vector<16x128xf32>
      tpu.vector_store %arg9[%c0_9, %c0_10], %15 {strides = array<i32>} : memref<16x128xf32, #tpu.memory_space<vmem>>, vector<16x128xf32>,
    } else {
    }
    %c0_i32_2 = arith.constant 0 : i32
    %8 = arith.cmpi eq, %arg2, %c0_i32_2 : i32
    %9 = arith.extui %8 : i1 to i32
    %c0_i32_3 = arith.constant 0 : i32
    %10 = arith.cmpi ne, %9, %c0_i32_3 : i32
    scf.if %10 {
      %c0 = arith.constant 0 : index
      %c0_4 = arith.constant 0 : index
      %11 = vector.load %arg9[%c0, %c0_4] : memref<16x128xf32, #tpu.memory_space<vmem>>, vector<16x128xf32>
      %c0_5 = arith.constant 0 : index
      %c0_6 = arith.constant 0 : index
      %12 = vector.load %arg8[%c0_5, %c0_6] : memref<16x128xf32, #tpu.memory_space<vmem>>, vector<16x128xf32>
      tpu.vector_store %arg8[%c0_5, %c0_6], %11 {strides = array<i32>} : memref<16x128xf32, #tpu.memory_space<vmem>>, vector<16x128xf32>,
    } else {
    }
    return
  }
  func.func @transform_0(%arg0: i32, %arg1: i32, %arg2: i32, %arg3: memref<2x1xi32, #tpu.memory_space<smem>>, %arg4: memref<2xi32, #tpu.memory_space<smem>>) -> (i32, i32) {
    %0 = arith.index_cast %arg1 : i32 to index
    %1 = arith.index_cast %arg2 : i32 to index
    %2 = memref.load %arg3[%0, %1] : memref<2x1xi32, #tpu.memory_space<smem>>
    %c0_i32 = arith.constant 0 : i32
    return %arg0, %2 : i32, i32
  }
  func.func @transform_1(%arg0: i32, %arg1: i32, %arg2: i32, %arg3: memref<2x1xi32, #tpu.memory_space<smem>>, %arg4: memref<2xi32, #tpu.memory_space<smem>>) -> (i32, i32) {
    %0 = arith.index_cast %arg1 : i32 to index
    %1 = arith.index_cast %arg2 : i32 to index
    %2 = memref.load %arg3[%0, %1] : memref<2x1xi32, #tpu.memory_space<smem>>
    %c0_i32 = arith.constant 0 : i32
    return %2, %arg1 : i32, i32
  }
  func.func @transform_2(%arg0: i32, %arg1: i32, %arg2: i32, %arg3: memref<2x1xi32, #tpu.memory_space<smem>>, %arg4: memref<2xi32, #tpu.memory_space<smem>>) -> (i32, i32) {
    %c0_i32 = arith.constant 0 : i32
    %c0_i32_0 = arith.constant 0 : i32
    return %c0_i32, %arg1 : i32, i32
  }
  func.func @transform_3(%arg0: i32, %arg1: i32, %arg2: i32, %arg3: memref<2x1xi32, #tpu.memory_space<smem>>, %arg4: memref<2xi32, #tpu.memory_space<smem>>) -> (i32, i32) {
    %c0_i32 = arith.constant 0 : i32
    return %arg0, %arg1 : i32, i32
  }
}

</mosaic_0001>

<llo_original>
// kernel: tpu_custom_call.1
$region0: #{tpu_custom_call.1}
  #allocation0 [shape = 'u32[]', space=smem, size = 0x4, offset = 0x4, fixed_abs, tag = 'smem constant byte address 0x4 - core index']
  #allocation1 [shape = 'u32[144,128]{1,0:T(1,128)}', space=vmem, size = 0x12000, scoped, tag = 'internal scratch']
  #allocation2 [shape = 'f32[16,128]{1,0:T(8,128)}', space=vmem, size = 0x2000, scoped, tag = 'scratch operand']
  #allocation3 [shape = 's32[1]{0}', space=sflag, size = 0x4, scoped, tag = 'scoped memory for tpu_custom_call.1']
  #allocation4 [shape = 'u8[1024]{0}', space=smem, size = 0x400, scoped, tag = 'prefetched SMEM operand 0']
  #allocation5 [shape = 'u8[512]{0}', space=smem, size = 0x200, scoped, tag = 'prefetched SMEM operand 1']
  %s0 = inlined_call_operand.vmem [shape: s32[2,1], index: 0, kind: input, shape index: {}]
  %s1 = inlined_call_operand.vmem [shape: s32[2], index: 1, kind: input, shape index: {}]
  %s2 = inlined_call_operand.vmem [shape: bf16[16,128], index: 2, kind: input, shape index: {}]
  %s3 = inlined_call_operand.hbm [shape: bf16[128,256], index: 3, kind: input, shape index: {}]
  %s4 = inlined_call_operand.vmem [shape: f32[1,256], index: 4, kind: input, shape index: {}]
  %s5 = inlined_call_operand.hbm [shape: f32[16,256], index: 5, kind: output, shape index: {}]
  %s6 = sld [smem:[#allocation0]]
  $region61: #{tpu_custom_call.1} parent=0
    _
  %s8 = ssub.s32 1, %s6
  %s9 = scalar_select 0, %s8, %s6
  %s10 = sshll.u32 %s0, 4
  %s11 = int_to_ptr.vmem [resolvable:$true] %s10
  %13 = dma.vmem_to_smem %s11, 32, [#allocation4], [#allocation3]
  %s14 = sshll.u32 %s1, 4
  %s15 = int_to_ptr.vmem [resolvable:$true] %s14
  %17 = dma.vmem_to_smem %s15, 16, [#allocation5], [#allocation3]
  %18 = dma.done [#allocation3], 48
  %19 = sfence
  $region1: #{tpu_custom_call.1} parent=0
    #allocation6 [shape = 'u8[65536]{0}', space=vmem, size = 0x10000, scoped, tag = 'input window, operand 3']
    #allocation7 [shape = 's32[2]{0}', space=sflag, size = 0x8, scoped, tag = 'scoped memory for tpu_custom_call.1']
    #allocation8 [shape = 's32[2]{0}', space=sflag, size = 0x8, scoped, tag = 'scoped memory for tpu_custom_call.1']
    #allocation9 [shape = 'u8[16384]{0}', space=vmem, size = 0x4000, scoped, tag = 'output window, operand 0']
    %20 = vsyncpa [#allocation7], 0
    %s21 = scalar_lea.sflag [#allocation7], 1
    %22 = vsyncpa %s21, 0
    %23 = vsyncpa [#allocation8], 0
    %s24 = scalar_lea.sflag [#allocation8], 1
    %25 = vsyncpa %s24, 0
    loop: start=0, step=1, limit=4
    $region2: #{tpu_custom_call.1} parent=1 // loop_pre_header
      _
    $region3: #{tpu_custom_call.1} parent=1 // loop_header
      %s27 = sphi 0, %s31
      %p28 = scmp.ge.s32.totalorder %s27, 4
      %s34 = sphi 0, %s53
      %s35 = sphi 0, %s49
      %s36 = sphi 0, %s45
      %s37 = sphi 0, %s34
      %s38 = sphi 0, %s35
      %s39 = sphi 0, %s36
      %s40 = sphi 0, %s37
      %s41 = sphi 0, %s38
      %s42 = sphi 0, %s39
      %s74 = sphi 0, %s76
      %s77 = sphi 0, %s74
      %s78 = sphi 0, %s77
      %s94 = sphi 0, %s78
      %s118 = sphi 0, %s120
      %s121 = sphi 0, %s118
      %s122 = sphi 0, %s121
      %s138 = sphi 0, %s122
      %s144 = sphi 0, %s146
      %s147 = sphi 0, %s144
      %s148 = sphi 0, %s147
      %s164 = sphi 0, %s148
      %s172 = sphi 0, %s174
      %s175 = sphi 0, %s172
      %s176 = sphi 0, %s175
      %s192 = sphi 0, %s176
    $region4: #{tpu_custom_call.1} parent=1 // loop_header_branch
      %30 = sbr.rel (%p28) target = $region8
    $region5: #{tpu_custom_call.1} parent=1 // loop_body
      %s32 = ssub.s32 %s27, 1
      %s33 = ssub.s32 %s27, 2
      %s43 = sadd.s32 1, %s36
      %p44 = scmp.ge.s32.totalorder %s43, 1
      %s45 = scalar_select %p44, 0, %s43
      %s46 = sadd.s32 1, %s35
      %s47 = scalar_select %p44, %s46, %s35
      %p48 = scmp.ge.s32.totalorder %s47, 2
      %s49 = scalar_select %p48, 0, %s47
      %s50 = sadd.s32 1, %s34
      %s51 = scalar_select %p48, %s50, %s34
      %p52 = scmp.ge.s32.totalorder %s51, 1
      %s53 = scalar_select %p52, 0, %s51
      %s54 = sshra.s32 %s36, 7
      %s55 = sand.u32 %s36, 127
      %s56 = sadd.s32 %s54, %s35
      %s57 = smul.u32 %s56, 128
      %s58 = sshra.s32 %s36, 7
      %s59 = sand.u32 %s36, 127
      %s60 = sadd.s32 %s57, %s59
      %s61 = sld [smem:[#allocation4 + %s60]]
      %s62 = sshra.s32 %s45, 7
      %s63 = sand.u32 %s45, 127
      %s64 = sadd.s32 %s62, %s49
      %s65 = smul.u32 %s64, 128
      %s66 = sshra.s32 %s45, 7
      %s67 = sand.u32 %s45, 127
      %s68 = sadd.s32 %s65, %s67
      %s69 = sld [smem:[#allocation4 + %s68]]
      %s70 = ssub.s32 %s34, %s53
      %s71 = ssub.s32 %s61, %s69
      %s72 = sor.u32 %s70, %s71
      %p73 = scmp.eq.s32.totalorder %s72, 0
      %s75 = sadd.s32 %s74, 1
      %s76 = scalar_select %p73, %s74, %s75
      %p79 = pneg %p73
      %p80 = scmp.eq.s32.totalorder %s27, 1
      %p81 = por %p79, %p80
      %p82 = scmp.ne.s32.totalorder %s74, %s77
      %p83 = scmp.eq.s32.totalorder %s27, 0
      %p84 = por %p82, %p83
      %p85 = scmp.ne.s32.totalorder %s74, %s77
      %p86 = scmp.eq.s32.totalorder %s32, 1
      %p87 = por %p85, %p86
      %p88 = scmp.ne.s32.totalorder %s77, %s78
      %p89 = scmp.eq.s32.totalorder %s32, 0
      %p90 = por %p88, %p89
      %p91 = scmp.ne.s32.totalorder %s77, %s78
      %p92 = scmp.eq.s32.totalorder %s33, 1
      %p93 = por %p91, %p92
      %p95 = scmp.ne.s32.totalorder %s78, %s94
      %p96 = scmp.eq.s32.totalorder %s33, 0
      %p97 = por %p95, %p96
      %s98 = sshra.s32 %s36, 7
      %s99 = sand.u32 %s36, 127
      %s100 = sadd.s32 %s98, %s35
      %s101 = smul.u32 %s100, 128
      %s102 = sshra.s32 %s36, 7
      %s103 = sand.u32 %s36, 127
      %s104 = sadd.s32 %s101, %s103
      %s105 = sld [smem:[#allocation4 + %s104]]
      %s106 = sshra.s32 %s45, 7
      %s107 = sand.u32 %s45, 127
      %s108 = sadd.s32 %s106, %s49
      %s109 = smul.u32 %s108, 128
      %s110 = sshra.s32 %s45, 7
      %s111 = sand.u32 %s45, 127
      %s112 = sadd.s32 %s109, %s111
      %s113 = sld [smem:[#allocation4 + %s112]]
      %s114 = ssub.s32 %s105, %s113
      %s115 = ssub.s32 %s35, %s49
      %s116 = sor.u32 %s114, %s115
      %p117 = scmp.eq.s32.totalorder %s116, 0
      %s119 = sadd.s32 %s118, 1
      %s120 = scalar_select %p117, %s118, %s119
      %p123 = pneg %p117
      %p124 = scmp.eq.s32.totalorder %s27, 1
      %p125 = por %p123, %p124
      %p126 = scmp.ne.s32.totalorder %s118, %s121
      %p127 = scmp.eq.s32.totalorder %s27, 0
      %p128 = por %p126, %p127
      %p129 = scmp.ne.s32.totalorder %s118, %s121
      %p130 = scmp.eq.s32.totalorder %s32, 1
      %p131 = por %p129, %p130
      %p132 = scmp.ne.s32.totalorder %s121, %s122
      %p133 = scmp.eq.s32.totalorder %s32, 0
      %p134 = por %p132, %p133
      %p135 = scmp.ne.s32.totalorder %s121, %s122
      %p136 = scmp.eq.s32.totalorder %s33, 1
      %p137 = por %p135, %p136
      %p139 = scmp.ne.s32.totalorder %s122, %s138
      %p140 = scmp.eq.s32.totalorder %s33, 0
      %p141 = por %p139, %p140
      %s142 = ssub.s32 %s35, %s49
      %p143 = scmp.eq.s32.totalorder %s142, 0
      %s145 = sadd.s32 %s144, 1
      %s146 = scalar_select %p143, %s144, %s145
      %p149 = pneg %p143
      %p150 = scmp.eq.s32.totalorder %s27, 1
      %p151 = por %p149, %p150
      %p152 = scmp.ne.s32.totalorder %s144, %s147
      %p153 = scmp.eq.s32.totalorder %s27, 0
      %p154 = por %p152, %p153
      %p155 = scmp.ne.s32.totalorder %s144, %s147
      %p156 = scmp.eq.s32.totalorder %s32, 1
      %p157 = por %p155, %p156
      %p158 = scmp.ne.s32.totalorder %s147, %s148
      %p159 = scmp.eq.s32.totalorder %s32, 0
      %p160 = por %p158, %p159
      %p161 = scmp.ne.s32.totalorder %s147, %s148
      %p162 = scmp.eq.s32.totalorder %s33, 1
      %p163 = por %p161, %p162
      %p165 = scmp.ne.s32.totalorder %s148, %s164
      %p166 = scmp.eq.s32.totalorder %s33, 0
      %p167 = por %p165, %p166
      %s168 = ssub.s32 %s34, %s53
      %s169 = ssub.s32 %s35, %s49
      %s170 = sor.u32 %s168, %s169
      %p171 = scmp.eq.s32.totalorder %s170, 0
      %s173 = sadd.s32 %s172, 1
      %s174 = scalar_select %p171, %s172, %s173
      %p177 = pneg %p171
      %p178 = scmp.eq.s32.totalorder %s27, 1
      %p179 = por %p177, %p178
      %p180 = scmp.ne.s32.totalorder %s172, %s175
      %p181 = scmp.eq.s32.totalorder %s27, 0
      %p182 = por %p180, %p181
      %p183 = scmp.ne.s32.totalorder %s172, %s175
      %p184 = scmp.eq.s32.totalorder %s32, 1
      %p185 = por %p183, %p184
      %p186 = scmp.ne.s32.totalorder %s175, %s176
      %p187 = scmp.eq.s32.totalorder %s32, 0
      %p188 = por %p186, %p187
      %p189 = scmp.ne.s32.totalorder %s175, %s176
      %p190 = scmp.eq.s32.totalorder %s33, 1
      %p191 = por %p189, %p190
      %p193 = scmp.ne.s32.totalorder %s176, %s192
      %p194 = scmp.eq.s32.totalorder %s33, 0
      %p195 = por %p193, %p194
      %p196 = scmp.le.s32.totalorder 1, %s27
      %p197 = scmp.lt.s32.totalorder %s27, 3
      %p198 = pnand %p196, %p197
      %p199 = pneg %p198
      // Predicated region
      $region9: #{tpu_custom_call.1} parent=5 // pred_check
        _
      $region10: #{tpu_custom_call.1} parent=5 // pred_check_branch
        %201 = sbr.rel (%p198) target = $region12
      $region11: #{tpu_custom_call.1} parent=5 // pred_region
        %s202 = ssub.s32 %s27, 1
      $region12: #{tpu_custom_call.1} parent=5 // pred_fallthru
        _
      %p203 = scmp.lt.s32.totalorder %s27, 2
      // Predicated region
      $region13: #{tpu_custom_call.1} parent=5 // pred_check
        %p204 = pneg %p203
      $region14: #{tpu_custom_call.1} parent=5 // pred_check_branch
        %206 = sbr.rel (%p204) target = $region16
      $region15: #{tpu_custom_call.1} parent=5 // pred_region
        // Predicated region
        $region17: #{tpu_custom_call.1} parent=15 // pred_check
          %p207 = pneg %p84
        $region18: #{tpu_custom_call.1} parent=15 // pred_check_branch
          %209 = sbr.rel (%p207) target = $region20
        $region19: #{tpu_custom_call.1} parent=15 // pred_region
          %s210 = sshra.s32 %s36, 7
          %s211 = sand.u32 %s36, 127
          %s212 = sadd.s32 %s210, %s35
          %s213 = smul.u32 %s212, 128
          %s214 = sshra.s32 %s36, 7
          %s215 = sand.u32 %s36, 127
          %s216 = sadd.s32 %s213, %s215
          %s217 = sld [smem:[#allocation4 + %s216]]
          %s218 = smul.u32 2, %s34
          %p219 = scmp.lt.s32.totalorder %s218, 1
          %s220 = scalar_select %p219, %s218, 1
          %p221 = scmp.lt.s32.totalorder %s217, 0
          %s222 = scalar_select %p221, %s217, 0
          %s223 = sadd.s32 %s222, %s220
          %s224 = smul.addr %s223, 4
          %s225 = scalar_lea.vmem %s2, %s224
          %s226 = sshra.s32 %s36, 7
          %s227 = sand.u32 %s36, 127
          %s228 = sadd.s32 %s226, %s35
          %s229 = smul.u32 %s228, 128
          %s230 = sshra.s32 %s36, 7
          %s231 = sand.u32 %s36, 127
          %s232 = sadd.s32 %s229, %s231
          %s233 = sld [smem:[#allocation4 + %s232]]
          %s234 = smul.u32 2, %s34
        $region20: #{tpu_custom_call.1} parent=15 // pred_fallthru
          _
        // Predicated region
        $region21: #{tpu_custom_call.1} parent=15 // pred_check
          %p235 = pneg %p128
        $region22: #{tpu_custom_call.1} parent=15 // pred_check_branch
          %237 = sbr.rel (%p235) target = $region24
        $region23: #{tpu_custom_call.1} parent=15 // pred_region
          %s238 = sand.u32 %s118, 1
          %s239 = scalar_lea.sflag [#allocation7], %s238
          %s240 = sand.u32 %s118, 1
          %s241 = smul.addr %s240, 64
          %s242 = scalar_lea.vmem [#allocation6], %s241
          %s243 = sshra.s32 %s36, 7
          %s244 = sand.u32 %s36, 127
          %s245 = sadd.s32 %s243, %s35
          %s246 = smul.u32 %s245, 128
          %s247 = sshra.s32 %s36, 7
          %s248 = sand.u32 %s36, 127
          %s249 = sadd.s32 %s246, %s248
          %s250 = sld [smem:[#allocation4 + %s249]]
          %s251 = smul.u32 16, %s250
          %s253 = ssub.s32 1024, 1024
          %254 = vsyncadd %s239, %s253
          %s255 = smul.addr %s251, 2
          %s256 = sadd.s32 %s35, %s255
          %s257 = smul.addr %s256, 64
          %s258 = scalar_lea.hbm %s3, %s257
          %s259 = sshll.u32 %s242, 4
          %s260 = int_to_ptr.vmem [resolvable:$true] %s259
          %265 = dma.hbm_to_vmem [thread:$0]  %s258, 1024, %s260, %s239, 128, 64, 4
        $region24: #{tpu_custom_call.1} parent=15 // pred_fallthru
          _
        // Predicated region
        $region25: #{tpu_custom_call.1} parent=15 // pred_check
          %p266 = pneg %p154
        $region26: #{tpu_custom_call.1} parent=15 // pred_check_branch
          %268 = sbr.rel (%p266) target = $region28
        $region27: #{tpu_custom_call.1} parent=15 // pred_region
          %p269 = scmp.lt.s32.totalorder %s35, 1
          %s270 = scalar_select %p269, %s35, 1
          %s271 = scalar_lea.vmem %s4, %s270
        $region28: #{tpu_custom_call.1} parent=15 // pred_fallthru
          _
      $region16: #{tpu_custom_call.1} parent=5 // pred_fallthru
        _
      %p272 = scmp.le.s32.totalorder 1, %s27
      %p273 = scmp.lt.s32.totalorder %s27, 3
      %p274 = pnand %p272, %p273
      %p275 = pneg %p274
      // Predicated region
      $region29: #{tpu_custom_call.1} parent=5 // pred_check
        _
      $region30: #{tpu_custom_call.1} parent=5 // pred_check_branch
        %277 = sbr.rel (%p274) target = $region32
      $region31: #{tpu_custom_call.1} parent=5 // pred_region
        %s278 = ssub.s32 %s27, 1
        %s279 = sand.u32 %s121, 1
        %s280 = scalar_lea.sflag [#allocation7], %s279
        %s281 = sand.u32 %s121, 1
        %s282 = smul.addr %s281, 64
        %s283 = scalar_lea.vmem [#allocation6], %s282
        // Predicated region
        $region33: #{tpu_custom_call.1} parent=31 // pred_check
          %p284 = pneg %p134
        $region34: #{tpu_custom_call.1} parent=31 // pred_check_branch
          %286 = sbr.rel (%p284) target = $region36
        $region35: #{tpu_custom_call.1} parent=31 // pred_region
          %287 = dma.done %s280, 1024
        $region36: #{tpu_custom_call.1} parent=31 // pred_fallthru
          _
        %s288 = sshra.s32 %s39, 7
        %s289 = sand.u32 %s39, 127
        %s290 = sadd.s32 %s288, %s38
        %s291 = smul.u32 %s290, 128
        %s292 = sshra.s32 %s39, 7
        %s293 = sand.u32 %s39, 127
        %s294 = sadd.s32 %s291, %s293
        %s295 = sld [smem:[#allocation4 + %s294]]
        %s296 = smul.u32 2, %s37
        %p297 = scmp.lt.s32.totalorder %s296, 1
        %s298 = scalar_select %p297, %s296, 1
        %p299 = scmp.lt.s32.totalorder %s295, 0
        %s300 = scalar_select %p299, %s295, 0
        %s301 = sadd.s32 %s300, %s298
        %s302 = smul.addr %s301, 4
        %s303 = scalar_lea.vmem %s2, %s302
        %p304 = pneg %p90
        %p305 = pneg %p87
        %s306 = sand.u32 %s121, 1
        %s307 = scalar_lea.sflag [#allocation7], %s306
        %s308 = sand.u32 %s121, 1
        %s309 = smul.addr %s308, 64
        %s310 = scalar_lea.vmem [#allocation6], %s309
        %p311 = pneg %p134
        %p312 = pneg %p131
        %p313 = scmp.lt.s32.totalorder %s38, 1
        %s314 = scalar_select %p313, %s38, 1
        %s315 = scalar_lea.vmem %s4, %s314
        %p316 = pneg %p160
        %p317 = pneg %p157
        %p318 = pneg %p188
        %p319 = pneg %p185
        %s320 = sand.u32 %s175, 1
        %s321 = scalar_lea.sflag [#allocation8], %s320
        %s322 = sand.u32 %s175, 1
        %s323 = smul.addr %s322, 16
        %s324 = scalar_lea.vmem [#allocation9], %s323
        %s325 = sshra.s32 %s39, 7
        %s326 = sand.u32 %s39, 127
        %s327 = sadd.s32 %s325, %s38
        %s328 = smul.u32 %s327, 128
        %s329 = sshra.s32 %s39, 7
        %s330 = sand.u32 %s39, 127
        %s331 = sadd.s32 %s328, %s330
        %s332 = sld [smem:[#allocation4 + %s331]]
        %s333 = smul.u32 2, %s37
        %p334 = scmp.lt.s32.totalorder %s333, 1
        %s335 = scalar_select %p334, %s333, 1
        %p336 = scmp.lt.s32.totalorder %s332, 0
        %s337 = scalar_select %p336, %s332, 0
        %s338 = sadd.s32 %s337, %s335
        %s339 = smul.addr %s338, 4
        %s340 = scalar_lea.vmem %s2, %s339
        %s341 = sshra.s32 %s39, 7
        %s342 = sand.u32 %s39, 127
        %s343 = sadd.s32 %s341, %s38
        %s344 = smul.u32 %s343, 128
        %s345 = sshra.s32 %s39, 7
        %s346 = sand.u32 %s39, 127
        %s347 = sadd.s32 %s344, %s346
        %s348 = sld [smem:[#allocation4 + %s347]]
        %s349 = smul.u32 2, %s37
        %s350 = sshra.s32 %s39, 7
        %s351 = sand.u32 %s39, 127
        %s352 = sadd.s32 %s350, %s38
        %s353 = smul.u32 %s352, 128
        %s354 = sshra.s32 %s39, 7
        %s355 = sand.u32 %s39, 127
        %s356 = sadd.s32 %s353, %s355
        %s357 = sld [smem:[#allocation4 + %s356]]
        %s358 = smul.u32 16, %s357
        %p359 = scmp.lt.s32.totalorder %s38, 1
        %s360 = scalar_select %p359, %s38, 1
        %s361 = scalar_lea.vmem %s4, %s360
        %s362 = smul.u32 2, %s37
        %p364 = scmp.eq.s32.totalorder %s39, 0
        // Predicated region
        $region37: #{tpu_custom_call.1} parent=31 // pred_check
          %p365 = pneg %p364
        $region38: #{tpu_custom_call.1} parent=31 // pred_check_branch
          %367 = sbr.rel (%p365) target = $region40
        $region39: #{tpu_custom_call.1} parent=31 // pred_region
          %v368 = vld [vmem:[%s361] sm:$0x1]
          %v370 = vlaneseq
          %v371 = vshrl.u32 %v370, 7
          %v372 = vsub.s32 0, %v371
          %v373 = vrot.slane %v368, %v372
          %375 = vst [vmem:[#allocation2] sm:$0xff] %v373
          %376 = vst [vmem:[#allocation2 + $0x8] sm:$0xff] %v373
        $region40: #{tpu_custom_call.1} parent=31 // pred_fallthru
          _
        %s377 = sld [smem:[#allocation5 + %s38]]
        %p378 = scmp.lt.s32.totalorder %s39, %s377
        // Predicated region
        $region41: #{tpu_custom_call.1} parent=31 // pred_check
          %p379 = pneg %p378
        $region42: #{tpu_custom_call.1} parent=31 // pred_check_branch
          %381 = sbr.rel (%p379) target = $region44
        $region43: #{tpu_custom_call.1} parent=31 // pred_region
          %v382 = vld [vmem:[#allocation2] sm:$0xff]
          %v383 = vld [vmem:[#allocation2 + $0x8] sm:$0xff]
          %v384 = vld [vmem:[%s340] sm:$0xf]
          %v385 = vld [vmem:[%s340 + $0x4] sm:$0xf]
          %v386 = vld [vmem:[%s283] sm:$0xf]
          %v387 = vld [vmem:[%s283 + $0x4] sm:$0xf]
          %v388 = vld [vmem:[%s283 + $0x8] sm:$0xf]
          %v389 = vld [vmem:[%s283 + $0xc] sm:$0xf]
          %v390 = vld [vmem:[%s283 + $0x10] sm:$0xf]
          %v391 = vld [vmem:[%s283 + $0x14] sm:$0xf]
          %v392 = vld [vmem:[%s283 + $0x18] sm:$0xf]
          %v393 = vld [vmem:[%s283 + $0x1c] sm:$0xf]
          %v394 = vld [vmem:[%s283 + $0x20] sm:$0xf]
          %v395 = vld [vmem:[%s283 + $0x24] sm:$0xf]
          %v396 = vld [vmem:[%s283 + $0x28] sm:$0xf]
          %v397 = vld [vmem:[%s283 + $0x2c] sm:$0xf]
          %v398 = vld [vmem:[%s283 + $0x30] sm:$0xf]
          %v399 = vld [vmem:[%s283 + $0x34] sm:$0xf]
          %v400 = vld [vmem:[%s283 + $0x38] sm:$0xf]
          %v401 = vld [vmem:[%s283 + $0x3c] sm:$0xf]
          %v404 = vunpack.c.l.b16 %v384
          %v405 = vunpack.c.l.b16 %v385
          %v406 = vpack.c.b16 %v405, %v404
          %v424 = vunpack.c.l.b16 %v386
          %v425 = vunpack.c.l.b16 %v387
          %v426 = vunpack.c.l.b16 %v388
          %v427 = vunpack.c.l.b16 %v389
          %v428 = vunpack.c.l.b16 %v390
          %v429 = vunpack.c.l.b16 %v391
          %v430 = vunpack.c.l.b16 %v392
          %v431 = vunpack.c.l.b16 %v393
          %v432 = vunpack.c.l.b16 %v394
          %v433 = vunpack.c.l.b16 %v395
          %v434 = vunpack.c.l.b16 %v396
          %v435 = vunpack.c.l.b16 %v397
          %v436 = vunpack.c.l.b16 %v398
          %v437 = vunpack.c.l.b16 %v399
          %v438 = vunpack.c.l.b16 %v400
          %v439 = vunpack.c.l.b16 %v401
          %v440 = vpack.c.b16 %v425, %v424
          %v441 = vpack.c.b16 %v427, %v426
          %v442 = vpack.c.b16 %v429, %v428
          %v443 = vpack.c.b16 %v431, %v430
          %v444 = vpack.c.b16 %v433, %v432
          %v445 = vpack.c.b16 %v435, %v434
          %v446 = vpack.c.b16 %v437, %v436
          %v447 = vpack.c.b16 %v439, %v438
          %456 = vmatprep.subr.bf16.mxu0 0
          %457 = vmatpush1.bf16.msra.mxu0 %v440
          %458 = vmatprep.subr.bf16.mxu0 0
          %459 = vmatpush1.bf16.msra.mxu0 %v441
          %460 = vmatprep.subr.bf16.mxu0 0
          %461 = vmatpush1.bf16.msra.mxu0 %v442
          %462 = vmatprep.subr.bf16.mxu0 0
          %463 = vmatpush1.bf16.msra.mxu0 %v443
          %464 = vmatprep.subr.bf16.mxu0 0
          %465 = vmatpush1.bf16.msra.mxu0 %v444
          %466 = vmatprep.subr.bf16.mxu0 0
          %467 = vmatpush1.bf16.msra.mxu0 %v445
          %468 = vmatprep.subr.bf16.mxu0 0
          %469 = vmatpush1.bf16.msra.mxu0 %v446
          %470 = vmatprep.subr.bf16.mxu0 0
          %471 = vmatpush1.bf16.msra.mxu0 %v447
          %472 = vmatprep.subr.bf16.mxu0 0
          %473 = vmatpush1.bf16.msra.mxu0 0
          %474 = vmatprep.subr.bf16.mxu0 0
          %475 = vmatpush1.bf16.msra.mxu0 0
          %476 = vmatprep.subr.bf16.mxu0 0
          %477 = vmatpush1.bf16.msra.mxu0 0
          %478 = vmatprep.subr.bf16.mxu0 0
          %479 = vmatpush1.bf16.msra.mxu0 0
          %480 = vmatprep.subr.bf16.mxu0 0
          %481 = vmatpush1.bf16.msra.mxu0 0
          %482 = vmatprep.subr.bf16.mxu0 0
          %483 = vmatpush1.bf16.msra.mxu0 0
          %484 = vmatprep.subr.bf16.mxu0 0
          %485 = vmatpush1.bf16.msra.mxu0 0
          %486 = vmatprep.subr.bf16.mxu0 0
          %487 = vmatpush1.bf16.msra.mxu0 0
          %488 = vmatprep.mubr.bf16.mxu0 0
          %489 = vmatmul.mubr.bf16.gmra.mrb[0].mxu0 %v406
          %v490 = vpop.f32.mrb[0].mxu0
          %v491 = vadd.f32 0.0, %v490
          %v492 = vpop.f32.mrb[0].mxu0
          %v493 = vpop.f32.mrb[0].mxu0
          %v494 = vadd.f32 0.0, %v493
          %v495 = vpop.f32.mrb[0].mxu0
          %496 = vdwg.mxu0
          %v497 = vadd.f32 %v382, %v491
          %v498 = vadd.f32 %v383, %v494
          %499 = vst [vmem:[#allocation2] sm:$0xff] %v497
          %500 = vst [vmem:[#allocation2 + $0x8] sm:$0xff] %v498
        $region44: #{tpu_custom_call.1} parent=31 // pred_fallthru
          _
        // Predicated region
        $region45: #{tpu_custom_call.1} parent=31 // pred_check
          %p501 = pneg %p364
        $region46: #{tpu_custom_call.1} parent=31 // pred_check_branch
          %503 = sbr.rel (%p501) target = $region48
        $region47: #{tpu_custom_call.1} parent=31 // pred_region
          %v504 = vld [vmem:[#allocation2] sm:$0xff]
          %v505 = vld [vmem:[#allocation2 + $0x8] sm:$0xff]
          %506 = vst [vmem:[%s324] sm:$0xff] %v504
          %507 = vst [vmem:[%s324 + $0x8] sm:$0xff] %v505
        $region48: #{tpu_custom_call.1} parent=31 // pred_fallthru
          _
        %s508 = sand.u32 %s175, 1
        %s509 = scalar_lea.sflag [#allocation8], %s508
        %s510 = sand.u32 %s175, 1
        %s511 = smul.addr %s510, 16
        %s512 = scalar_lea.vmem [#allocation9], %s511
        // Predicated region
        $region49: #{tpu_custom_call.1} parent=31 // pred_check
          %p513 = pneg %p185
        $region50: #{tpu_custom_call.1} parent=31 // pred_check_branch
          %515 = sbr.rel (%p513) target = $region52
        $region51: #{tpu_custom_call.1} parent=31 // pred_region
          %s516 = smul.u32 2, %s37
          %s518 = ssub.s32 256, 256
          %519 = vsyncadd %s509, %s518
          %s520 = smul.addr %s516, 2
          %s521 = sadd.s32 %s38, %s520
          %s522 = smul.addr %s521, 128
          %s523 = scalar_lea.hbm %s5, %s522
          %s524 = sshll.u32 %s512, 4
          %s525 = int_to_ptr.vmem [resolvable:$true] %s524
          %530 = dma.vmem_to_hbm [thread:$0]  %s525, 256, %s523, %s509, 128, 256, 8
        $region52: #{tpu_custom_call.1} parent=31 // pred_fallthru
          _
      $region32: #{tpu_custom_call.1} parent=5 // pred_fallthru
        _
      %p531 = scmp.le.s32.totalorder 2, %s27
      // Predicated region
      $region53: #{tpu_custom_call.1} parent=5 // pred_check
        %p532 = pneg %p531
      $region54: #{tpu_custom_call.1} parent=5 // pred_check_branch
        %534 = sbr.rel (%p532) target = $region56
      $region55: #{tpu_custom_call.1} parent=5 // pred_region
        %s535 = ssub.s32 %s27, 2
        // Predicated region
        $region57: #{tpu_custom_call.1} parent=55 // pred_check
          %p536 = pneg %p191
        $region58: #{tpu_custom_call.1} parent=55 // pred_check_branch
          %538 = sbr.rel (%p536) target = $region60
        $region59: #{tpu_custom_call.1} parent=55 // pred_region
          %s539 = sand.u32 %s176, 1
          %s540 = scalar_lea.sflag [#allocation8], %s539
          %s541 = sand.u32 %s176, 1
          %s542 = smul.addr %s541, 16
          %s543 = scalar_lea.vmem [#allocation9], %s542
          %544 = dma.done %s540, 256
        $region60: #{tpu_custom_call.1} parent=55 // pred_fallthru
          _
      $region56: #{tpu_custom_call.1} parent=5 // pred_fallthru
        _
    $region6: #{tpu_custom_call.1} parent=1 // loop_footer
      %s31 = sadd.s32 1, %s27
    $region7: #{tpu_custom_call.1} parent=1 // loop_footer_branch
      %26 = sbr.rel target = $region3
    $region8: #{tpu_custom_call.1} parent=1 // loop_exit
      _
    %545 = vsyncpa [#allocation7], 1
    %s546 = scalar_lea.sflag [#allocation7], 1
    %547 = vsyncpa %s546, 1
    %548 = vsyncpa [#allocation8], 1
    %s549 = scalar_lea.sflag [#allocation8], 1
    %550 = vsyncpa %s549, 1

</llo_original>
